<compile_context>
chip_gen: v7x
topology: tpu7x:2x2x1
jax: 0.10.0
libtpu: 0.0.40
codegen_flags: <defaults>
</compile_context>

<pallas_src>
import functools
import math

import jax
import jax.numpy as jnp
from jax.experimental import pallas as pl
from jax.experimental.pallas import tpu as pltpu


def _round_up(x, m):
    return ((x + m - 1) // m) * m


# ----------------------------------------------------------------------------
# Pallas kernel: transform one (blk_r, C_p) tile of uniforms in [0, 1) into
# scheme-scaled weight values and store them.
#
# TODO(synk): the on-chip PRNG (pltpu.prng_seed / prng_random_bits) would avoid
# reading the uniforms from HBM, but those primitives have no CPU/interpret
# lowering in the eval sandbox, so randoms are drawn host-side with jax.random
# and only the distribution transform runs in the kernel.
# ----------------------------------------------------------------------------
def _fill_kernel(u_ref, out_ref, *, dist, scale):
    if dist == "uniform":
        # uniform(-scale, scale), fused as one mul + one add (no VPU f32 FMA on v5e/v6e)
        out_ref[...] = (u_ref[...] * (2.0 * scale) - scale).astype(out_ref.dtype)
    else:
        # Full Box-Muller pair: keep BOTH cos and sin branches, so each uniform
        # pair yields two normals -> half the random draws and only 2 EUP
        # transcendentals per output element instead of 3.
        blk_r = out_ref.shape[0]
        half = blk_r // 2
        u1 = u_ref[0:half, :]
        u2 = u_ref[half:blk_r, :]
        r = jnp.sqrt(-2.0 * jnp.log(1.0 - u1))       # 1-u1 in (0, 1] -> log is safe
        theta = (2.0 * jnp.pi) * u2
        z0 = r * jnp.cos(theta)
        z1 = r * jnp.sin(theta)
        if dist == "trunc_normal":
            # TODO(synk): torch.nn.init.trunc_normal_ uses inverse-CDF sampling;
            # clipping is an approximation (boundary mass, no re-normalization).
            z0 = jnp.clip(z0, -2.0, 2.0)
            z1 = jnp.clip(z1, -2.0, 2.0)
        out_ref[0:half, :] = (z0 * scale).astype(out_ref.dtype)
        out_ref[half:blk_r, :] = (z1 * scale).astype(out_ref.dtype)


def _pallas_fill(shape, seed, dist, scale):
    """Fill a 2-D (fan_out, fan_in) float32 weight tensor via a Pallas kernel."""
    if len(shape) != 2:
        raise ValueError("Only 2-D (fan_out, fan_in) weight tensors are supported")
    R, C = shape

    # Lane-dense, (8, 128)-aligned padded layout; sliced back at the end.
    C_p = _round_up(C, 128)
    R8 = _round_up(R, 8)

    # Large row tiles amortize the ~0.35 us per-grid-step overhead, but cap the
    # per-buffer footprint at 2 MiB so (1 input + 1 output) x double-buffering
    # (~8 MiB total) stays well under scoped-VMEM defaults on v5e/v6e and under
    # v7x's 64 MiB physical VMEM.
    rows_cap = max(8, ((2 * 1024 * 1024) // (C_p * 4)) // 8 * 8)
    blk_r = min(512, R8, rows_cap)
    R_p = _round_up(R8, blk_r)          # grid divides exactly -> no partial tiles

    # Host-side PRNG: independent, collision-free streams per tensor/seed.
    key = jax.random.PRNGKey(seed)
    u = jax.random.uniform(key, (R_p, C_p), dtype=jnp.float32)

    kernel = functools.partial(_fill_kernel, dist=dist, scale=float(scale))
    out = pl.pallas_call(
        kernel,
        out_shape=jax.ShapeDtypeStruct((R_p, C_p), jnp.float32),
        grid=(R_p // blk_r,),
        in_specs=[pl.BlockSpec((blk_r, C_p), lambda i: (i, 0))],
        out_specs=pl.BlockSpec((blk_r, C_p), lambda i: (i, 0)),
        compiler_params=pltpu.CompilerParams(
            # tiles are fully independent -> shard across both TCs on v7x; no-op on v5e/v6e
            dimension_semantics=("parallel",),
            vmem_limit_bytes=32 << 20,
        ),
    )(u)
    return out[:R, :C]


# ----------------------------------------------------------------------------
# Python-side equivalent of the `Initialization` module.
# ----------------------------------------------------------------------------
class Config:
    def __init__(self, initialization="kaiming_normal", fan="fan_in", gain=1.0):
        self.initialization = initialization
        self.fan = fan
        self.gain = gain


def _fans(shape):
    # torch convention for 2-D tensors: fan_in = shape[1], fan_out = shape[0]
    return shape[1], shape[0]


class Initialization:
    """Mirrors the PyTorch module: forward() returns an initializer callable.

    The returned callable takes (shape, seed) and returns a freshly
    initialized jnp.float32 array (functional analogue of torch in-place init).
    """

    def __init__(self, config: Config):
        self.config = config

    # --- individual initializers (scale math = glue, fill = Pallas kernel) ---
    def kaiming_normal_initializer(self, shape, seed=0):
        # nn.init.kaiming_normal_(x, mode=config.fan, nonlinearity='sigmoid') -> gain = 1
        fan_in, fan_out = _fans(shape)
        fan = fan_in if self.config.fan == "fan_in" else fan_out
        std = 1.0 / math.sqrt(fan)
        return _pallas_fill(shape, seed, "normal", std)

    def kaiming_uniform_initializer(self, shape, seed=0):
        # nn.init.kaiming_uniform_ defaults: a=0, mode='fan_in', leaky_relu -> gain=sqrt(2)
        fan_in, _ = _fans(shape)
        bound = math.sqrt(2.0) * math.sqrt(3.0 / fan_in)
        return _pallas_fill(shape, seed, "uniform", bound)

    def xavier_normal_initializer(self, shape, seed=0):
        fan_in, fan_out = _fans(shape)
        std = self.config.gain * math.sqrt(2.0 / (fan_in + fan_out))
        return _pallas_fill(shape, seed, "normal", std)

    def xavier_uniform_initializer(self, shape, seed=0):
        fan_in, fan_out = _fans(shape)
        bound = math.sqrt(6.0 / (fan_in + fan_out))
        return _pallas_fill(shape, seed, "uniform", bound)

    def trunc_normal_initializer(self, shape, seed=0):
        # nn.init.trunc_normal_ defaults: mean=0, std=1, a=-2, b=2
        return _pallas_fill(shape, seed, "trunc_normal", 1.0)

    @staticmethod
    def uniform_initializer(shape, seed=0):
        stdv = 1.0 / math.sqrt(6)
        return _pallas_fill(shape, seed, "uniform", stdv)

    def orthogonal_initializer(self, shape, seed=0):
        # TODO(synk): nn.init.orthogonal_ requires a QR decomposition; no clean Pallas TPU equivalent.
        raise NotImplementedError("orthogonal init not implemented in Pallas")

    @staticmethod
    def sparse_initializer(shape, seed=0):
        # TODO(synk): nn.init.sparse_ zeroes an exact random subset of rows per column
        # (permutation-based); no clean Pallas TPU equivalent.
        raise NotImplementedError("sparse init not implemented in Pallas")

    # --- forward: select and return the initializer callable ---
    def forward(self):
        init = self.config.initialization
        if init == "kaiming_normal":
            return self.kaiming_normal_initializer
        elif init == "kaiming_uniform":
            return self.kaiming_uniform_initializer
        elif init == "orthogonal":
            return self.orthogonal_initializer
        elif init == "sparse":
            return self.sparse_initializer
        elif init == "trunc_normal":
            return self.trunc_normal_initializer
        elif init == "xavier_normal":
            return self.xavier_normal_initializer
        elif init == "xavier_uniform":
            return self.xavier_uniform_initializer
        else:
            return self.uniform_initializer

    __call__ = forward


if __name__ == "__main__":
    key = jax.random.PRNGKey(0)
    seeds = jax.random.randint(key, (3,), 0, 2**31 - 1)
    s0, s1, s2 = (int(seeds[0]), int(seeds[1]), int(seeds[2]))

    weight_shape = (32, 128)  # (fan_out, fan_in), e.g. a Linear(128 -> 32) weight

    # kaiming_normal path (Box-Muller normal branch)
    init_kn = Initialization(Config("kaiming_normal", fan="fan_in", gain=1.0))()
    w_kn = init_kn(weight_shape, s0)
    jax.block_until_ready(w_kn)

    # default/uniform path (uniform branch)
    init_u = Initialization(Config("something_else"))()
    w_u = init_u(weight_shape, s1)
    jax.block_until_ready(w_u)

    # xavier_uniform path
    init_xu = Initialization(Config("xavier_uniform"))()
    w_xu = init_xu(weight_shape, s2)
    jax.block_until_ready(w_xu)

    assert w_kn.shape == weight_shape and w_kn.dtype == jnp.float32
    assert w_u.shape == weight_shape and w_u.dtype == jnp.float32
    assert w_xu.shape == weight_shape and w_xu.dtype == jnp.float32

    # uniform bound check
    b_u = 1.0 / math.sqrt(6)
    assert bool(jnp.all(jnp.abs(w_u) <= b_u + 1e-6))
    b_xu = math.sqrt(6.0 / (weight_shape[0] + weight_shape[1]))
    assert bool(jnp.all(jnp.abs(w_xu) <= b_xu + 1e-6))

    # loose statistical check for the normal branch (std = 1/sqrt(fan_in))
    expected_std = 1.0 / math.sqrt(weight_shape[1])
    sample_std = float(jnp.std(w_kn))
    assert 0.5 * expected_std < sample_std < 1.5 * expected_std
    assert bool(jnp.all(jnp.isfinite(w_kn)))

    print("KERNEL_OK")
</pallas_src>

<mosaic_0001>
module attributes {stable_mosaic.version = 11 : i64} {
  func.func @_fill_kernel(%arg0: i32, %arg1: memref<32x128xf32, #tpu.memory_space<vmem>>, %arg2: memref<32x128xf32, #tpu.memory_space<vmem>>) attributes {dimension_semantics = [#tpu.dimension_semantics<parallel>], iteration_bounds = array<i64: 1>, scalar_prefetch = 0 : i64, scratch_operands = 0 : i64, tpu.core_type = #tpu.core_type<tc>, window_params = [{transform_indices = @transform_0, window_bounds = array<i64: 32, 128>}, {transform_indices = @transform_1, window_bounds = array<i64: 32, 128>}]} {
    %c0 = arith.constant 0 : index
    %c0_0 = arith.constant 0 : index
    %0 = vector.load %arg1[%c0, %c0_0] : memref<32x128xf32, #tpu.memory_space<vmem>>, vector<16x128xf32>
    %c16 = arith.constant 16 : index
    %c0_1 = arith.constant 0 : index
    %1 = vector.load %arg1[%c16, %c0_1] : memref<32x128xf32, #tpu.memory_space<vmem>>, vector<16x128xf32>
    %cst = arith.constant 1.000000e+00 : f32
    %2 = vector.broadcast %cst : f32 to vector<16x128xf32>
    %3 = arith.subf %2, %0 : vector<16x128xf32>
    %4 = math.log %3 : vector<16x128xf32>
    %cst_2 = arith.constant -2.000000e+00 : f32
    %5 = vector.broadcast %cst_2 : f32 to vector<16x128xf32>
    %6 = arith.mulf %5, %4 : vector<16x128xf32>
    %7 = math.sqrt %6 : vector<16x128xf32>
    %cst_3 = arith.constant 6.28318548 : f32
    %8 = vector.broadcast %cst_3 : f32 to vector<16x128xf32>
    %9 = arith.mulf %8, %1 : vector<16x128xf32>
    %10 = math.cos %9 : vector<16x128xf32>
    %11 = arith.mulf %7, %10 : vector<16x128xf32>
    %12 = math.sin %9 : vector<16x128xf32>
    %13 = arith.mulf %7, %12 : vector<16x128xf32>
    %cst_4 = arith.constant 0.0883883461 : f32
    %14 = vector.broadcast %cst_4 : f32 to vector<16x128xf32>
    %15 = arith.mulf %11, %14 : vector<16x128xf32>
    %c0_5 = arith.constant 0 : index
    %c0_6 = arith.constant 0 : index
    %16 = vector.load %arg2[%c0_5, %c0_6] : memref<32x128xf32, #tpu.memory_space<vmem>>, vector<16x128xf32>
    tpu.vector_store %arg2[%c0_5, %c0_6], %15 {strides = array<i32>} : memref<32x128xf32, #tpu.memory_space<vmem>>, vector<16x128xf32>,
    %cst_7 = arith.constant 0.0883883461 : f32
    %17 = vector.broadcast %cst_7 : f32 to vector<16x128xf32>
    %18 = arith.mulf %13, %17 : vector<16x128xf32>
    %c16_8 = arith.constant 16 : index
    %c0_9 = arith.constant 0 : index
    %19 = vector.load %arg2[%c16_8, %c0_9] : memref<32x128xf32, #tpu.memory_space<vmem>>, vector<16x128xf32>
    tpu.vector_store %arg2[%c16_8, %c0_9], %18 {strides = array<i32>} : memref<32x128xf32, #tpu.memory_space<vmem>>, vector<16x128xf32>,
    return
  }
  func.func @transform_0(%arg0: i32) -> (i32, i32) {
    %c0_i32 = arith.constant 0 : i32
    %c0_i32_0 = arith.constant 0 : i32
    return %arg0, %c0_i32 : i32, i32
  }
  func.func @transform_1(%arg0: i32) -> (i32, i32) {
    %c0_i32 = arith.constant 0 : i32
    %c0_i32_0 = arith.constant 0 : i32
    return %arg0, %c0_i32 : i32, i32
  }
}

</mosaic_0001>

<llo_original>
// kernel: tpu_custom_call.1
$region0: #{tpu_custom_call.1}
  #allocation0 [shape = 'u32[]', space=smem, size = 0x4, offset = 0x4, fixed_abs, tag = 'smem constant byte address 0x4 - core index']
  #allocation1 [shape = 'u32[144,128]{1,0:T(1,128)}', space=vmem, size = 0x12000, scoped, tag = 'internal scratch']
  %s0 = inlined_call_operand.hbm [shape: f32[32,128], index: 0, kind: input, shape index: {}]
  %s1 = inlined_call_operand.hbm [shape: f32[32,128], index: 1, kind: output, shape index: {}]
  %s2 = sld [smem:[#allocation0]]
  $region18: #{tpu_custom_call.1} parent=0
    _
  %s4 = ssub.s32 1, %s2
  %s5 = scalar_select 0, %s4, %s2
  $region1: #{tpu_custom_call.1} parent=0
    #allocation2 [shape = 'u8[16384]{0}', space=vmem, size = 0x4000, scoped, tag = 'input window, operand 0, single buffered']
    #allocation3 [shape = 's32[1]{0}', space=sflag, size = 0x4, scoped, tag = 'scoped memory for tpu_custom_call.1']
    #allocation4 [shape = 's32[1]{0}', space=sflag, size = 0x4, scoped, tag = 'scoped memory for tpu_custom_call.1']
    #allocation5 [shape = 'u8[16384]{0}', space=vmem, size = 0x4000, scoped, tag = 'output window, operand 0, single buffered']
    %6 = vsyncpa [#allocation3], 0
    %7 = vsyncpa [#allocation4], 0
    // Predicated region
    $region2: #{tpu_custom_call.1} parent=1 // pred_check
      _
    $region3: #{tpu_custom_call.1} parent=1 // pred_check_branch
      %9 = sbr.rel (0) target = $region5
    $region4: #{tpu_custom_call.1} parent=1 // pred_region
      %s11 = ssub.s32 512, 512
      %12 = vsyncadd [#allocation3], %s11
      %s13 = sshll.u32 [#allocation2], 4
      %s14 = int_to_ptr.vmem [resolvable:$true] %s13
      %19 = dma.hbm_to_vmem [thread:$0]  %s0, 512, %s14, [#allocation3], 128, 128, 8
    $region5: #{tpu_custom_call.1} parent=1 // pred_fallthru
      _
    // Predicated region
    $region6: #{tpu_custom_call.1} parent=1 // pred_check
      _
    $region7: #{tpu_custom_call.1} parent=1 // pred_check_branch
      %21 = sbr.rel (0) target = $region9
    $region8: #{tpu_custom_call.1} parent=1 // pred_region
      %22 = dma.done [#allocation3], 512
    $region9: #{tpu_custom_call.1} parent=1 // pred_fallthru
      _
    %v23 = vld [vmem:[#allocation2] sm:$0xff]
    %v24 = vld [vmem:[#allocation2 + $0x8] sm:$0xff]
    %v25 = vld [vmem:[#allocation2 + $0x10] sm:$0xff]
    %v26 = vld [vmem:[#allocation2 + $0x18] sm:$0xff]
    %v27 = vsub.f32 1.0, %v23
    %v28 = vsub.f32 1.0, %v24
    %v29 = vlog2.pop %v27
    %v30 = vmul.f32 %v29, 0.6931472
    %v31 = vlog2.pop %v28
    %v32 = vmul.f32 %v31, 0.6931472
    %v33 = vmul.f32 %v30, -2.0
    %v34 = vmul.f32 %v32, -2.0
    %v35 = vrsqrt.pop %v33
    %v36 = vmul.f32 %v33, %v35
    %vm37 = vcmp.eq.f32.partialorder %v33, inf
    %v38 = vsel %vm37, %v33, %v36
    %vm39 = vcmp.eq.f32.partialorder %v33, 0.0
    %v40 = vand.u32 %v33, 2147483648
    %v41 = vsel %vm39, %v40, %v38
    %v42 = vrsqrt.pop %v34
    %v43 = vmul.f32 %v34, %v42
    %vm44 = vcmp.eq.f32.partialorder %v34, inf
    %v45 = vsel %vm44, %v34, %v43
    %vm46 = vcmp.eq.f32.partialorder %v34, 0.0
    %v47 = vand.u32 %v34, 2147483648
    %v48 = vsel %vm46, %v47, %v45
    %v49 = vmul.f32 %v25, 6.2831855
    %v50 = vmul.f32 %v26, 6.2831855
    %v51 = vand.u32 2147483647, %v49
    %vm52 = vcmp.le.f32.partialorder %v51, 0.7853982
    %vm53 = vcmp.lt.s32.totalorder %v49, 0
    %v54 = vand.u32 %v49, 2139095040
    %v55 = vshrl.u32 %v54, 23
    %v56 = vsub.s32 %v55, 127
    %v57 = vand.u32 2147483647, %v49
    %v58 = vand.u32 %v57, 8388607
    %v59 = vor.u32 %v58, 8388608
    %v60 = vsub.s32 0, %v59
    %v61 = vadd.s32 %v56, 1
    %vm62 = vcmp.gt.s32.totalorder %v61, 0
    %v63 = vsel %vm62, %v61, 0
    %v64 = vshrl.u32 %v63, 5
    %v65 = vand.u32 %v63, 31
    %v66 = vsub.s32 32, %v65
    %v67 = vshrl.u32 683565275, %v66
    %v68 = vshll.u32 683565275, %v65
    %v69 = vshrl.u32 2475754826, %v66
    %v70 = vor.u32 %v68, %v69
    %v71 = vshll.u32 2475754826, %v65
    %v72 = vshrl.u32 2131351028, %v66
    %v73 = vor.u32 %v71, %v72
    %v74 = vshll.u32 2131351028, %v65
    %v75 = vshrl.u32 2102212464, %v66
    %v76 = vor.u32 %v74, %v75
    %v77 = vshll.u32 2102212464, %v65
    %v78 = vshrl.u32 920167782, %v66
    %v79 = vor.u32 %v77, %v78
    %v80 = vshll.u32 920167782, %v65
    %v81 = vshrl.u32 1326507024, %v66
    %v82 = vor.u32 %v80, %v81
    %vm83 = vcmp.lt.s32.totalorder %v64, 1
    %vm84 = vcmp.lt.s32.totalorder %v64, 2
    %vm85 = vcmp.lt.s32.totalorder %v64, 3
    %vm86 = vcmp.lt.s32.totalorder %v64, 4
    %v87 = vsel %vm83, %v67, %v70
    %v88 = vsel %vm86, %v76, 2102212464
    %v89 = vsel %vm85, %v73, %v88
    %v90 = vsel %vm84, %v87, %v89
    %v91 = vsel %vm83, %v70, %v73
    %v92 = vsel %vm86, %v79, 920167782
    %v93 = vsel %vm85, %v76, %v92
    %v94 = vsel %vm84, %v91, %v93
    %v95 = vsel %vm83, %v73, %v76
    %v96 = vsel %vm86, %v82, 1326507024
    %v97 = vsel %vm85, %v79, %v96
    %v98 = vsel %vm84, %v95, %v97
    %v99 = vshll.u32 %v59, 8
    %v100 = vmul.u32.u64.compose %v99, %v98
    %v101 = vextract.low.u32 %v100
    %v102 = vextract.high.u32 %v100
    %v103 = vmul.u32.u64.compose %v99, %v94
    %v104 = vextract.low.u32 %v103
    %v105 = vextract.high.u32 %v103
    %v106 = vmul.u32 %v99, %v90
    %v107 = vadd.s32 %v102, %v104
    %vm108 = vc.u32 %v102, %v104
    %v109 = vadd.s32 %v105, 1
    %v110 = vsel %vm108, %v109, %v105
    %v111 = vadd.s32 %v106, %v110
    %v112 = vadd.s32 %v111, 536870912
    %v113 = vshrl.u32 %v112, 30
    %v114 = vshll.u32 %v113, 30
    %v115 = vsub.s32 %v111, %v114
    %vm116 = vcmp.lt.s32.totalorder %v115, 0
    %v117 = vsub.s32 0, %v115
    %v118 = vsel %vm116, %v117, %v115
    %v119 = vclz %v118
    %v120 = vsub.s32 %v119, 2
    %vm121 = vcmp.gt.s32.totalorder 0, %v120
    %v122 = vsel %vm121, 0, %v120
    %v123 = vsub.s32 32, %v122
    %v124 = vshll.u32 %v115, %v122
    %v125 = vshrl.u32 %v107, %v123
    %v126 = vor.u32 %v124, %v125
    %v127 = vsub.s32 4294967266, %v122
    %v128 = vadd.s32 %v127, 127
    %v129 = vshll.u32 %v128, 23
    %v130 = vor.u32 4788187, %v129
    %v131 = vand.u32 2147483647, %v130
    %v133 = vcvt.s32.f32 %v126
    %v134 = vmul.f32 %v133, %v131
    %v135 = vxor.u32 %v134, 2147483648
    %v136 = vsel %vm53, %v135, %v134
    %v137 = vsub.s32 4, %v113
    %v138 = vsel %vm53, %v137, %v113
    %v139 = vsel %vm52, %v49, %v136
    %v140 = vsel %vm52, 0, %v138
    %v141 = vcosq.f32.pop %v139
    %v142 = vsinq.f32.pop %v139
    %vm143 = vweird.f32 %v49
    %v144 = vand.u32 %v140, 3
    %vm145 = vcmp.lt.s32.totalorder %v144, 2
    %vm146 = vcmp.eq.s32.totalorder %v144, 0
    %v147 = vxor.u32 %v142, 2147483648
    %v148 = vsel %vm146, %v141, %v147
    %vm149 = vcmp.eq.s32.totalorder %v144, 2
    %v150 = vxor.u32 %v141, 2147483648
    %v151 = vsel %vm149, %v150, %v142
    %v152 = vsel %vm145, %v148, %v151
    %v153 = vsel %vm143, nan, %v152
    %v154 = vand.u32 2147483647, %v50
    %vm155 = vcmp.le.f32.partialorder %v154, 0.7853982
    %vm156 = vcmp.lt.s32.totalorder %v50, 0
    %v157 = vand.u32 %v50, 2139095040
    %v158 = vshrl.u32 %v157, 23
    %v159 = vsub.s32 %v158, 127
    %v160 = vand.u32 2147483647, %v50
    %v161 = vand.u32 %v160, 8388607
    %v162 = vor.u32 %v161, 8388608
    %v163 = vsub.s32 0, %v162
    %v164 = vadd.s32 %v159, 1
    %vm165 = vcmp.gt.s32.totalorder %v164, 0
    %v166 = vsel %vm165, %v164, 0
    %v167 = vshrl.u32 %v166, 5
    %v168 = vand.u32 %v166, 31
    %v169 = vsub.s32 32, %v168
    %v170 = vshrl.u32 683565275, %v169
    %v171 = vshll.u32 683565275, %v168
    %v172 = vshrl.u32 2475754826, %v169
    %v173 = vor.u32 %v171, %v172
    %v174 = vshll.u32 2475754826, %v168
    %v175 = vshrl.u32 2131351028, %v169
    %v176 = vor.u32 %v174, %v175
    %v177 = vshll.u32 2131351028, %v168
    %v178 = vshrl.u32 2102212464, %v169
    %v179 = vor.u32 %v177, %v178
    %v180 = vshll.u32 2102212464, %v168
    %v181 = vshrl.u32 920167782, %v169
    %v182 = vor.u32 %v180, %v181
    %v183 = vshll.u32 920167782, %v168
    %v184 = vshrl.u32 1326507024, %v169
    %v185 = vor.u32 %v183, %v184
    %vm186 = vcmp.lt.s32.totalorder %v167, 1
    %vm187 = vcmp.lt.s32.totalorder %v167, 2
    %vm188 = vcmp.lt.s32.totalorder %v167, 3
    %vm189 = vcmp.lt.s32.totalorder %v167, 4
    %v190 = vsel %vm186, %v170, %v173
    %v191 = vsel %vm189, %v179, 2102212464
    %v192 = vsel %vm188, %v176, %v191
    %v193 = vsel %vm187, %v190, %v192
    %v194 = vsel %vm186, %v173, %v176
    %v195 = vsel %vm189, %v182, 920167782
    %v196 = vsel %vm188, %v179, %v195
    %v197 = vsel %vm187, %v194, %v196
    %v198 = vsel %vm186, %v176, %v179
    %v199 = vsel %vm189, %v185, 1326507024
    %v200 = vsel %vm188, %v182, %v199
    %v201 = vsel %vm187, %v198, %v200
    %v202 = vshll.u32 %v162, 8
    %v203 = vmul.u32.u64.compose %v202, %v201
    %v204 = vextract.low.u32 %v203
    %v205 = vextract.high.u32 %v203
    %v206 = vmul.u32.u64.compose %v202, %v197
    %v207 = vextract.low.u32 %v206
    %v208 = vextract.high.u32 %v206
    %v209 = vmul.u32 %v202, %v193
    %v210 = vadd.s32 %v205, %v207
    %vm211 = vc.u32 %v205, %v207
    %v212 = vadd.s32 %v208, 1
    %v213 = vsel %vm211, %v212, %v208
    %v214 = vadd.s32 %v209, %v213
    %v215 = vadd.s32 %v214, 536870912
    %v216 = vshrl.u32 %v215, 30
    %v217 = vshll.u32 %v216, 30
    %v218 = vsub.s32 %v214, %v217
    %vm219 = vcmp.lt.s32.totalorder %v218, 0
    %v220 = vsub.s32 0, %v218
    %v221 = vsel %vm219, %v220, %v218
    %v222 = vclz %v221
    %v223 = vsub.s32 %v222, 2
    %vm224 = vcmp.gt.s32.totalorder 0, %v223
    %v225 = vsel %vm224, 0, %v223
    %v226 = vsub.s32 32, %v225
    %v227 = vshll.u32 %v218, %v225
    %v228 = vshrl.u32 %v210, %v226
    %v229 = vor.u32 %v227, %v228
    %v230 = vsub.s32 4294967266, %v225
    %v231 = vadd.s32 %v230, 127
    %v232 = vshll.u32 %v231, 23
    %v233 = vor.u32 4788187, %v232
    %v234 = vand.u32 2147483647, %v233
    %v236 = vcvt.s32.f32 %v229
    %v237 = vmul.f32 %v236, %v234
    %v238 = vxor.u32 %v237, 2147483648
    %v239 = vsel %vm156, %v238, %v237
    %v240 = vsub.s32 4, %v216
    %v241 = vsel %vm156, %v240, %v216
    %v242 = vsel %vm155, %v50, %v239
    %v243 = vsel %vm155, 0, %v241
    %v244 = vcosq.f32.pop %v242
    %v245 = vsinq.f32.pop %v242
    %vm246 = vweird.f32 %v50
    %v247 = vand.u32 %v243, 3
    %vm248 = vcmp.lt.s32.totalorder %v247, 2
    %vm249 = vcmp.eq.s32.totalorder %v247, 0
    %v250 = vxor.u32 %v245, 2147483648
    %v251 = vsel %vm249, %v244, %v250
    %vm252 = vcmp.eq.s32.totalorder %v247, 2
    %v253 = vxor.u32 %v244, 2147483648
    %v254 = vsel %vm252, %v253, %v245
    %v255 = vsel %vm248, %v251, %v254
    %v256 = vsel %vm246, nan, %v255
    %v257 = vmul.f32 %v41, %v153
    %v258 = vmul.f32 %v48, %v256
    %v259 = vand.u32 2147483647, %v49
    %vm260 = vcmp.le.f32.partialorder %v259, 0.7853982
    %vm261 = vcmp.lt.s32.totalorder %v49, 0
    %v262 = vand.u32 %v49, 2139095040
    %v263 = vshrl.u32 %v262, 23
    %v264 = vsub.s32 %v263, 127
    %v265 = vand.u32 2147483647, %v49
    %v266 = vand.u32 %v265, 8388607
    %v267 = vor.u32 %v266, 8388608
    %v268 = vsub.s32 0, %v267
    %v269 = vadd.s32 %v264, 1
    %vm270 = vcmp.gt.s32.totalorder %v269, 0
    %v271 = vsel %vm270, %v269, 0
    %v272 = vshrl.u32 %v271, 5
    %v273 = vand.u32 %v271, 31
    %v274 = vsub.s32 32, %v273
    %v275 = vshrl.u32 683565275, %v274
    %v276 = vshll.u32 683565275, %v273
    %v277 = vshrl.u32 2475754826, %v274
    %v278 = vor.u32 %v276, %v277
    %v279 = vshll.u32 2475754826, %v273
    %v280 = vshrl.u32 2131351028, %v274
    %v281 = vor.u32 %v279, %v280
    %v282 = vshll.u32 2131351028, %v273
    %v283 = vshrl.u32 2102212464, %v274
    %v284 = vor.u32 %v282, %v283
    %v285 = vshll.u32 2102212464, %v273
    %v286 = vshrl.u32 920167782, %v274
    %v287 = vor.u32 %v285, %v286
    %v288 = vshll.u32 920167782, %v273
    %v289 = vshrl.u32 1326507024, %v274
    %v290 = vor.u32 %v288, %v289
    %vm291 = vcmp.lt.s32.totalorder %v272, 1
    %vm292 = vcmp.lt.s32.totalorder %v272, 2
    %vm293 = vcmp.lt.s32.totalorder %v272, 3
    %vm294 = vcmp.lt.s32.totalorder %v272, 4
    %v295 = vsel %vm291, %v275, %v278
    %v296 = vsel %vm294, %v284, 2102212464
    %v297 = vsel %vm293, %v281, %v296
    %v298 = vsel %vm292, %v295, %v297
    %v299 = vsel %vm291, %v278, %v281
    %v300 = vsel %vm294, %v287, 920167782
    %v301 = vsel %vm293, %v284, %v300
    %v302 = vsel %vm292, %v299, %v301
    %v303 = vsel %vm291, %v281, %v284
    %v304 = vsel %vm294, %v290, 1326507024
    %v305 = vsel %vm293, %v287, %v304
    %v306 = vsel %vm292, %v303, %v305
    %v307 = vshll.u32 %v267, 8
    %v308 = vmul.u32.u64.compose %v307, %v306
    %v309 = vextract.low.u32 %v308
    %v310 = vextract.high.u32 %v308
    %v311 = vmul.u32.u64.compose %v307, %v302
    %v312 = vextract.low.u32 %v311
    %v313 = vextract.high.u32 %v311
    %v314 = vmul.u32 %v307, %v298
    %v315 = vadd.s32 %v310, %v312
    %vm316 = vc.u32 %v310, %v312
    %v317 = vadd.s32 %v313, 1
    %v318 = vsel %vm316, %v317, %v313
    %v319 = vadd.s32 %v314, %v318
    %v320 = vadd.s32 %v319, 536870912
    %v321 = vshrl.u32 %v320, 30
    %v322 = vshll.u32 %v321, 30
    %v323 = vsub.s32 %v319, %v322
    %vm324 = vcmp.lt.s32.totalorder %v323, 0
    %v325 = vsub.s32 0, %v323
    %v326 = vsel %vm324, %v325, %v323
    %v327 = vclz %v326
    %v328 = vsub.s32 %v327, 2
    %vm329 = vcmp.gt.s32.totalorder 0, %v328
    %v330 = vsel %vm329, 0, %v328
    %v331 = vsub.s32 32, %v330
    %v332 = vshll.u32 %v323, %v330
    %v333 = vshrl.u32 %v315, %v331
    %v334 = vor.u32 %v332, %v333
    %v335 = vsub.s32 4294967266, %v330
    %v336 = vadd.s32 %v335, 127
    %v337 = vshll.u32 %v336, 23
    %v338 = vor.u32 4788187, %v337
    %v339 = vand.u32 2147483647, %v338
    %v341 = vcvt.s32.f32 %v334
    %v342 = vmul.f32 %v341, %v339
    %v343 = vxor.u32 %v342, 2147483648
    %v344 = vsel %vm261, %v343, %v342
    %v345 = vsub.s32 4, %v321
    %v346 = vsel %vm261, %v345, %v321
    %v347 = vsel %vm260, %v49, %v344
    %v348 = vsel %vm260, 0, %v346
    %v349 = vcosq.f32.pop %v347
    %v350 = vsinq.f32.pop %v347
    %vm351 = vweird.f32 %v49
    %v352 = vadd.s32 %v348, 3
    %v353 = vand.u32 %v352, 3
    %vm354 = vcmp.lt.s32.totalorder %v353, 2
    %vm355 = vcmp.eq.s32.totalorder %v353, 0
    %v356 = vxor.u32 %v350, 2147483648
    %v357 = vsel %vm355, %v349, %v356
    %vm358 = vcmp.eq.s32.totalorder %v353, 2
    %v359 = vxor.u32 %v349, 2147483648
    %v360 = vsel %vm358, %v359, %v350
    %v361 = vsel %vm354, %v357, %v360
    %v362 = vsel %vm351, nan, %v361
    %v363 = vand.u32 2147483647, %v50
    %vm364 = vcmp.le.f32.partialorder %v363, 0.7853982
    %vm365 = vcmp.lt.s32.totalorder %v50, 0
    %v366 = vand.u32 %v50, 2139095040
    %v367 = vshrl.u32 %v366, 23
    %v368 = vsub.s32 %v367, 127
    %v369 = vand.u32 2147483647, %v50
    %v370 = vand.u32 %v369, 8388607
    %v371 = vor.u32 %v370, 8388608
    %v372 = vsub.s32 0, %v371
    %v373 = vadd.s32 %v368, 1
    %vm374 = vcmp.gt.s32.totalorder %v373, 0
    %v375 = vsel %vm374, %v373, 0
    %v376 = vshrl.u32 %v375, 5
    %v377 = vand.u32 %v375, 31
    %v378 = vsub.s32 32, %v377
    %v379 = vshrl.u32 683565275, %v378
    %v380 = vshll.u32 683565275, %v377
    %v381 = vshrl.u32 2475754826, %v378
    %v382 = vor.u32 %v380, %v381
    %v383 = vshll.u32 2475754826, %v377
    %v384 = vshrl.u32 2131351028, %v378
    %v385 = vor.u32 %v383, %v384
    %v386 = vshll.u32 2131351028, %v377
    %v387 = vshrl.u32 2102212464, %v378
    %v388 = vor.u32 %v386, %v387
    %v389 = vshll.u32 2102212464, %v377
    %v390 = vshrl.u32 920167782, %v378
    %v391 = vor.u32 %v389, %v390
    %v392 = vshll.u32 920167782, %v377
    %v393 = vshrl.u32 1326507024, %v378
    %v394 = vor.u32 %v392, %v393
    %vm395 = vcmp.lt.s32.totalorder %v376, 1
    %vm396 = vcmp.lt.s32.totalorder %v376, 2
    %vm397 = vcmp.lt.s32.totalorder %v376, 3
    %vm398 = vcmp.lt.s32.totalorder %v376, 4
    %v399 = vsel %vm395, %v379, %v382
    %v400 = vsel %vm398, %v388, 2102212464
    %v401 = vsel %vm397, %v385, %v400
    %v402 = vsel %vm396, %v399, %v401
    %v403 = vsel %vm395, %v382, %v385
    %v404 = vsel %vm398, %v391, 920167782
    %v405 = vsel %vm397, %v388, %v404
    %v406 = vsel %vm396, %v403, %v405
    %v407 = vsel %vm395, %v385, %v388
    %v408 = vsel %vm398, %v394, 1326507024
    %v409 = vsel %vm397, %v391, %v408
    %v410 = vsel %vm396, %v407, %v409
    %v411 = vshll.u32 %v371, 8
    %v412 = vmul.u32.u64.compose %v411, %v410
    %v413 = vextract.low.u32 %v412
    %v414 = vextract.high.u32 %v412
    %v415 = vmul.u32.u64.compose %v411, %v406
    %v416 = vextract.low.u32 %v415
    %v417 = vextract.high.u32 %v415
    %v418 = vmul.u32 %v411, %v402
    %v419 = vadd.s32 %v414, %v416
    %vm420 = vc.u32 %v414, %v416
    %v421 = vadd.s32 %v417, 1
    %v422 = vsel %vm420, %v421, %v417
    %v423 = vadd.s32 %v418, %v422
    %v424 = vadd.s32 %v423, 536870912
    %v425 = vshrl.u32 %v424, 30
    %v426 = vshll.u32 %v425, 30
    %v427 = vsub.s32 %v423, %v426
    %vm428 = vcmp.lt.s32.totalorder %v427, 0
    %v429 = vsub.s32 0, %v427
    %v430 = vsel %vm428, %v429, %v427
    %v431 = vclz %v430
    %v432 = vsub.s32 %v431, 2
    %vm433 = vcmp.gt.s32.totalorder 0, %v432
    %v434 = vsel %vm433, 0, %v432
    %v435 = vsub.s32 32, %v434
    %v436 = vshll.u32 %v427, %v434
    %v437 = vshrl.u32 %v419, %v435
    %v438 = vor.u32 %v436, %v437
    %v439 = vsub.s32 4294967266, %v434
    %v440 = vadd.s32 %v439, 127
    %v441 = vshll.u32 %v440, 23
    %v442 = vor.u32 4788187, %v441
    %v443 = vand.u32 2147483647, %v442
    %v445 = vcvt.s32.f32 %v438
    %v446 = vmul.f32 %v445, %v443
    %v447 = vxor.u32 %v446, 2147483648
    %v448 = vsel %vm365, %v447, %v446
    %v449 = vsub.s32 4, %v425
    %v450 = vsel %vm365, %v449, %v425
    %v451 = vsel %vm364, %v50, %v448
    %v452 = vsel %vm364, 0, %v450
    %v453 = vcosq.f32.pop %v451
    %v454 = vsinq.f32.pop %v451
    %vm455 = vweird.f32 %v50
    %v456 = vadd.s32 %v452, 3
    %v457 = vand.u32 %v456, 3
    %vm458 = vcmp.lt.s32.totalorder %v457, 2
    %vm459 = vcmp.eq.s32.totalorder %v457, 0
    %v460 = vxor.u32 %v454, 2147483648
    %v461 = vsel %vm459, %v453, %v460
    %vm462 = vcmp.eq.s32.totalorder %v457, 2
    %v463 = vxor.u32 %v453, 2147483648
    %v464 = vsel %vm462, %v463, %v454
    %v465 = vsel %vm458, %v461, %v464
    %v466 = vsel %vm455, nan, %v465
    %v467 = vmul.f32 %v41, %v362
    %v468 = vmul.f32 %v48, %v466
    %v469 = vmul.f32 %v257, 0.088388346
    %v470 = vmul.f32 %v258, 0.088388346
    %471 = vst [vmem:[#allocation5] sm:$0xff] %v469
    %472 = vst [vmem:[#allocation5 + $0x8] sm:$0xff] %v470
    %v473 = vmul.f32 %v467, 0.088388346
    %v474 = vmul.f32 %v468, 0.088388346
    %475 = vst [vmem:[#allocation5 + $0x10] sm:$0xff] %v473
    %476 = vst [vmem:[#allocation5 + $0x18] sm:$0xff] %v474
    // Predicated region
    $region10: #{tpu_custom_call.1} parent=1 // pred_check
      _
    $region11: #{tpu_custom_call.1} parent=1 // pred_check_branch
      %478 = sbr.rel (0) target = $region13
    $region12: #{tpu_custom_call.1} parent=1 // pred_region
      %s480 = ssub.s32 512, 512
      %481 = vsyncadd [#allocation4], %s480
      %s482 = sshll.u32 [#allocation5], 4
      %s483 = int_to_ptr.vmem [resolvable:$true] %s482
      %488 = dma.vmem_to_hbm [thread:$0]  %s483, 512, %s1, [#allocation4], 128, 128, 8
    $region13: #{tpu_custom_call.1} parent=1 // pred_fallthru
      _
    // Predicated region
    $region14: #{tpu_custom_call.1} parent=1 // pred_check
      _
    $region15: #{tpu_custom_call.1} parent=1 // pred_check_branch
      %490 = sbr.rel (0) target = $region17
    $region16: #{tpu_custom_call.1} parent=1 // pred_region
      %491 = dma.done [#allocation4], 512
    $region17: #{tpu_custom_call.1} parent=1 // pred_fallthru
      _
    %492 = vsyncpa [#allocation3], 1
    %493 = vsyncpa [#allocation4], 1

</llo_original>
